<compile_context>
chip_gen: v6e
topology: v6e:2x2x1
jax: 0.10.0
libtpu: 0.0.40
codegen_flags: <defaults>
</compile_context>

<pallas_src>
import jax
import jax.numpy as jnp
from jax.experimental import pallas as pl
from jax.experimental.pallas import tpu as pltpu

HIDDEN_DIM = 3
NUM_LAYERS = 1
LANES = 128


def _make_kernel(B, S, F):
    H = HIDDEN_DIM

    def kernel(x_ref, slab_ref, scal_ref, out_ref):
        # x_ref   : (B*S, F)        batch-major rows (row = b*S + t), no wrapper copy
        # slab_ref: (F+S+1, H*128)  rows 0..F-1   : W_ih^T, column k replicated
        #                                           across lane group [k*128,(k+1)*128)
        #                           rows F..F+S-1 : fcFinal.W^T (zero padded to 3*128)
        #                           row  F+S      : fused final bias (zero padded)
        # scal_ref: (15,) SMEM      [W_hh row-major (9), b_ih+b_hh (3), fcHidden.W (3)]
        # out_ref : (B, 128)        lanes 0..F-1 = out, lanes F..F+H-1 = final hidden

        # ---- scalar parameters straight from SMEM (sregs) -------------------
        whh = [[scal_ref[k * H + j] for j in range(H)] for k in range(H)]
        bc = [scal_ref[H * H + k] for k in range(H)]          # b_ih + b_hh
        wfh = [scal_ref[H * H + H + k] for k in range(H)]     # fcHidden weight

        # ---- hoisted input projection (one MXU dot, off the dependent chain)
        x = x_ref[...]                                         # (B*S, F)
        # batch-major -> seq-major rows (row = t*B + b); one-time sublane shuffle,
        # independent of the recurrence so it overlaps with the serial chain.
        x_seq = jnp.concatenate(
            [x[b * S + t: b * S + t + 1, :] for t in range(S) for b in range(B)],
            axis=0)                                            # (S*B, F)
        xp = jnp.dot(x_seq, slab_ref[0:F, :],
                     preferred_element_type=jnp.float32)       # (S*B, H*128)
        # lane group k of row t*B+b holds (x[b,t] @ W_ih^T)[k] broadcast over 128 lanes

        # ---- serial recurrence: only VPU scalar-FMAs + EUP tanh on the chain -
        h = [jnp.zeros((B, LANES), jnp.float32) for _ in range(H)]
        out_acc = jnp.zeros((B, LANES), jnp.float32)

        for t in range(S):                                     # static unroll
            xpt = xp[t * B:(t + 1) * B, :]                     # (B, H*128) contiguous
            pre = []
            for k in range(H):
                p = xpt[:, k * LANES:(k + 1) * LANES] + bc[k]  # 128-aligned vreg select
                for j in range(H):
                    p = p + whh[k][j] * h[j]                   # vreg x sreg FMA (VPU)
                pre.append(p)
            # independent tanh pushes issued back-to-back -> pipeline the single EUP
            h = [jnp.tanh(p) for p in pre]                     # lane-broadcast (B,128)
            # fcHidden (bias folded into final bias): y_t stays lane-broadcast
            y = wfh[0] * h[0]
            for k in range(1, H):
                y = y + wfh[k] * h[k]
            # fcFinal as a rank-1 VPU accumulate; lanes >= F stay exactly zero
            out_acc = out_acc + y * slab_ref[F + t:F + t + 1, 0:LANES]

        out_acc = out_acc + slab_ref[F + S:F + S + 1, 0:LANES]  # fused final bias

        # ---- pack final hidden state into lanes F..F+H-1 of the single output
        lane = jax.lax.broadcasted_iota(jnp.int32, (B, LANES), 1)
        packed = out_acc
        for k in range(H):
            packed = jnp.where(lane == F + k, h[k], packed)
        out_ref[...] = packed

    return kernel


def next_word_rnn_forward(x, params):
    """x: (B, S, F) float32, batch-first like the PyTorch module (requires B > 1)."""
    B, S, F = x.shape
    H = HIDDEN_DIM
    # The reference `out.squeeze()` would also drop the batch dim when B == 1.
    assert B > 1, "NextWordRNN forward assumes batch size > 1 (squeeze semantics)"
    assert F + H <= LANES

    # Contiguous reshape only: no transpose / HBM copy of x before the kernel.
    x_flat = x.reshape(B * S, F)

    # ---- pack parameters: one VMEM slab + one 1-D SMEM scalar vector --------
    wih_t = params["w_ih"].T                                    # (F, H)
    wih_wide = jnp.repeat(wih_t, LANES, axis=1)                 # (F, H*128)
    wff_t = params["fc_final_w"].T                              # (S, F)
    wff_pad = jnp.pad(wff_t, ((0, 0), (0, H * LANES - F)))      # (S, H*128)
    # Fold fcHidden bias into the final bias: bff' = bff + bfh * sum_t W_ff^T[t]
    bff_fused = (params["fc_final_b"]
                 + params["fc_hidden_b"][0] * jnp.sum(wff_t, axis=0))       # (F,)
    bff_pad = jnp.pad(bff_fused, (0, H * LANES - F)).reshape(1, H * LANES)
    slab = jnp.concatenate([wih_wide, wff_pad, bff_pad], axis=0)  # (F+S+1, H*128)

    scal = jnp.concatenate([params["w_hh"].reshape(-1),           # (9,)
                            params["b_ih"] + params["b_hh"],      # (3,)
                            params["fc_hidden_w"].reshape(-1)])   # (3,)  -> (15,)

    vmem = pl.BlockSpec(memory_space=pltpu.MemorySpace.VMEM)
    smem = pl.BlockSpec(memory_space=pltpu.MemorySpace.SMEM)
    packed = pl.pallas_call(
        _make_kernel(B, S, F),
        out_shape=jax.ShapeDtypeStruct((B, LANES), jnp.float32),
        in_specs=[vmem, vmem, smem],
        out_specs=vmem,
    )(x_flat, slab, scal)

    out = packed[:, :F]
    hidden = packed[:, F:F + H].reshape(NUM_LAYERS, B, H)
    return out, hidden


def reference_forward(x, params):
    """Pure-JAX reference mirroring the PyTorch forward exactly."""
    B, S, F = x.shape
    H = HIDDEN_DIM
    h = jnp.zeros((B, H), jnp.float32)
    hs = []
    for t in range(S):
        h = jnp.tanh(x[:, t, :] @ params["w_ih"].T + params["b_ih"]
                     + h @ params["w_hh"].T + params["b_hh"])
        hs.append(h)
    rnn_out = jnp.stack(hs, axis=1)                                   # (B, S, H)
    out = rnn_out @ params["fc_hidden_w"].T + params["fc_hidden_b"]   # (B, S, 1)
    out = out.squeeze()                                               # (B, S)
    out = out @ params["fc_final_w"].T + params["fc_final_b"]         # (B, F)
    return out.reshape(-1, F), h.reshape(1, B, H)


if __name__ == "__main__":
    B, S, F = 2, 8, 32          # batchSize, numSequence, numFeature
    H = HIDDEN_DIM

    key = jax.random.PRNGKey(0)
    keys = jax.random.split(key, 9)

    def uinit(k, shape, fan):
        bound = 1.0 / float(fan) ** 0.5
        return jax.random.uniform(k, shape, jnp.float32, -bound, bound)

    # Deterministic synthetic params with torch-default-like init scales.
    params = {
        "w_ih": uinit(keys[0], (H, F), H),         # nn.RNN weight_ih_l0
        "w_hh": uinit(keys[1], (H, H), H),         # nn.RNN weight_hh_l0
        "b_ih": uinit(keys[2], (H,), H),
        "b_hh": uinit(keys[3], (H,), H),
        "fc_hidden_w": uinit(keys[4], (1, H), H),  # Linear(3, 1)
        "fc_hidden_b": uinit(keys[5], (1,), H),
        "fc_final_w": uinit(keys[6], (F, S), S),   # Linear(S, F)
        "fc_final_b": uinit(keys[7], (F,), S),
    }
    x = jax.random.normal(keys[8], (B, S, F), jnp.float32)

    out, hidden = next_word_rnn_forward(x, params)
    jax.block_until_ready((out, hidden))

    ref_out, ref_hidden = reference_forward(x, params)
    assert out.shape == (B, F) and hidden.shape == (NUM_LAYERS, B, H)
    assert jnp.allclose(out, ref_out, atol=1e-4, rtol=1e-4)
    assert jnp.allclose(hidden, ref_hidden, atol=1e-4, rtol=1e-4)

    print("KERNEL_OK")
</pallas_src>

<mosaic_0001>
module attributes {stable_mosaic.version = 11 : i64} {
  func.func @kernel(%arg0: memref<16x32xf32, #tpu.memory_space<vmem>>, %arg1: memref<41x384xf32, #tpu.memory_space<vmem>>, %arg2: memref<15xf32, #tpu.memory_space<smem>>, %arg3: memref<2x128xf32, #tpu.memory_space<vmem>>) attributes {dimension_semantics = [], scalar_prefetch = 0 : i64, scratch_operands = 0 : i64, tpu.core_type = #tpu.core_type<tc>} {
    %c0 = arith.constant 0 : index
    %0 = memref.load %arg2[%c0] : memref<15xf32, #tpu.memory_space<smem>>
    %c1 = arith.constant 1 : index
    %1 = memref.load %arg2[%c1] : memref<15xf32, #tpu.memory_space<smem>>
    %c2 = arith.constant 2 : index
    %2 = memref.load %arg2[%c2] : memref<15xf32, #tpu.memory_space<smem>>
    %c3 = arith.constant 3 : index
    %3 = memref.load %arg2[%c3] : memref<15xf32, #tpu.memory_space<smem>>
    %c4 = arith.constant 4 : index
    %4 = memref.load %arg2[%c4] : memref<15xf32, #tpu.memory_space<smem>>
    %c5 = arith.constant 5 : index
    %5 = memref.load %arg2[%c5] : memref<15xf32, #tpu.memory_space<smem>>
    %c6 = arith.constant 6 : index
    %6 = memref.load %arg2[%c6] : memref<15xf32, #tpu.memory_space<smem>>
    %c7 = arith.constant 7 : index
    %7 = memref.load %arg2[%c7] : memref<15xf32, #tpu.memory_space<smem>>
    %c8 = arith.constant 8 : index
    %8 = memref.load %arg2[%c8] : memref<15xf32, #tpu.memory_space<smem>>
    %c9 = arith.constant 9 : index
    %9 = memref.load %arg2[%c9] : memref<15xf32, #tpu.memory_space<smem>>
    %c10 = arith.constant 10 : index
    %10 = memref.load %arg2[%c10] : memref<15xf32, #tpu.memory_space<smem>>
    %c11 = arith.constant 11 : index
    %11 = memref.load %arg2[%c11] : memref<15xf32, #tpu.memory_space<smem>>
    %c12 = arith.constant 12 : index
    %12 = memref.load %arg2[%c12] : memref<15xf32, #tpu.memory_space<smem>>
    %c13 = arith.constant 13 : index
    %13 = memref.load %arg2[%c13] : memref<15xf32, #tpu.memory_space<smem>>
    %c14 = arith.constant 14 : index
    %14 = memref.load %arg2[%c14] : memref<15xf32, #tpu.memory_space<smem>>
    %c0_0 = arith.constant 0 : index
    %c0_1 = arith.constant 0 : index
    %15 = vector.load %arg0[%c0_0, %c0_1] : memref<16x32xf32, #tpu.memory_space<vmem>>, vector<16x32xf32>
    %16 = vector.extract_strided_slice %15 {offsets = [0, 0], sizes = [1, 32], strides = [1, 1]} : vector<16x32xf32> to vector<1x32xf32>
    %17 = vector.extract_strided_slice %15 {offsets = [8, 0], sizes = [1, 32], strides = [1, 1]} : vector<16x32xf32> to vector<1x32xf32>
    %18 = vector.extract_strided_slice %15 {offsets = [1, 0], sizes = [1, 32], strides = [1, 1]} : vector<16x32xf32> to vector<1x32xf32>
    %19 = vector.extract_strided_slice %15 {offsets = [9, 0], sizes = [1, 32], strides = [1, 1]} : vector<16x32xf32> to vector<1x32xf32>
    %20 = vector.extract_strided_slice %15 {offsets = [2, 0], sizes = [1, 32], strides = [1, 1]} : vector<16x32xf32> to vector<1x32xf32>
    %21 = vector.extract_strided_slice %15 {offsets = [10, 0], sizes = [1, 32], strides = [1, 1]} : vector<16x32xf32> to vector<1x32xf32>
    %22 = vector.extract_strided_slice %15 {offsets = [3, 0], sizes = [1, 32], strides = [1, 1]} : vector<16x32xf32> to vector<1x32xf32>
    %23 = vector.extract_strided_slice %15 {offsets = [11, 0], sizes = [1, 32], strides = [1, 1]} : vector<16x32xf32> to vector<1x32xf32>
    %24 = vector.extract_strided_slice %15 {offsets = [4, 0], sizes = [1, 32], strides = [1, 1]} : vector<16x32xf32> to vector<1x32xf32>
    %25 = vector.extract_strided_slice %15 {offsets = [12, 0], sizes = [1, 32], strides = [1, 1]} : vector<16x32xf32> to vector<1x32xf32>
    %26 = vector.extract_strided_slice %15 {offsets = [5, 0], sizes = [1, 32], strides = [1, 1]} : vector<16x32xf32> to vector<1x32xf32>
    %27 = vector.extract_strided_slice %15 {offsets = [13, 0], sizes = [1, 32], strides = [1, 1]} : vector<16x32xf32> to vector<1x32xf32>
    %28 = vector.extract_strided_slice %15 {offsets = [6, 0], sizes = [1, 32], strides = [1, 1]} : vector<16x32xf32> to vector<1x32xf32>
    %29 = vector.extract_strided_slice %15 {offsets = [14, 0], sizes = [1, 32], strides = [1, 1]} : vector<16x32xf32> to vector<1x32xf32>
    %30 = vector.extract_strided_slice %15 {offsets = [7, 0], sizes = [1, 32], strides = [1, 1]} : vector<16x32xf32> to vector<1x32xf32>
    %31 = vector.extract_strided_slice %15 {offsets = [15, 0], sizes = [1, 32], strides = [1, 1]} : vector<16x32xf32> to vector<1x32xf32>
    %32 = tpu.concatenate %16, %17, %18, %19, %20, %21, %22, %23, %24, %25, %26, %27, %28, %29, %30, %31 in 0 : vector<1x32xf32>, vector<1x32xf32>, vector<1x32xf32>, vector<1x32xf32>, vector<1x32xf32>, vector<1x32xf32>, vector<1x32xf32>, vector<1x32xf32>, vector<1x32xf32>, vector<1x32xf32>, vector<1x32xf32>, vector<1x32xf32>, vector<1x32xf32>, vector<1x32xf32>, vector<1x32xf32>, vector<1x32xf32> -> vector<16x32xf32>
    %c0_2 = arith.constant 0 : index
    %c0_3 = arith.constant 0 : index
    %33 = vector.load %arg1[%c0_2, %c0_3] : memref<41x384xf32, #tpu.memory_space<vmem>>, vector<32x384xf32>
    %cst = arith.constant dense<0.000000e+00> : vector<16x384xf32>
    %34 = tpu.matmul %32, %33, %cst {dimension_numbers = #tpu.dot_dimension_numbers<[1], [0], [0], [1], [0, 0, 1, 1], [], []>} : vector<16x32xf32>, vector<32x384xf32>, vector<16x384xf32> -> vector<16x384xf32>
    %cst_4 = arith.constant 0.000000e+00 : f32
    %35 = vector.broadcast %cst_4 : f32 to vector<2x128xf32>
    %cst_5 = arith.constant 0.000000e+00 : f32
    %36 = vector.broadcast %cst_5 : f32 to vector<2x128xf32>
    %cst_6 = arith.constant 0.000000e+00 : f32
    %37 = vector.broadcast %cst_6 : f32 to vector<2x128xf32>
    %cst_7 = arith.constant 0.000000e+00 : f32
    %38 = vector.broadcast %cst_7 : f32 to vector<2x128xf32>
    %39 = vector.extract_strided_slice %34 {offsets = [0, 0], sizes = [2, 384], strides = [1, 1]} : vector<16x384xf32> to vector<2x384xf32>
    %40 = vector.extract_strided_slice %39 {offsets = [0, 0], sizes = [2, 128], strides = [1, 1]} : vector<2x384xf32> to vector<2x128xf32>
    %41 = vector.broadcast %9 : f32 to vector<2x128xf32>
    %42 = arith.addf %40, %41 : vector<2x128xf32>
    %43 = vector.broadcast %0 : f32 to vector<2x128xf32>
    %44 = arith.mulf %43, %35 : vector<2x128xf32>
    %45 = arith.addf %42, %44 : vector<2x128xf32>
    %46 = vector.broadcast %1 : f32 to vector<2x128xf32>
    %47 = arith.mulf %46, %36 : vector<2x128xf32>
    %48 = arith.addf %45, %47 : vector<2x128xf32>
    %49 = vector.broadcast %2 : f32 to vector<2x128xf32>
    %50 = arith.mulf %49, %37 : vector<2x128xf32>
    %51 = arith.addf %48, %50 : vector<2x128xf32>
    %52 = vector.extract_strided_slice %39 {offsets = [0, 128], sizes = [2, 128], strides = [1, 1]} : vector<2x384xf32> to vector<2x128xf32>
    %53 = vector.broadcast %10 : f32 to vector<2x128xf32>
    %54 = arith.addf %52, %53 : vector<2x128xf32>
    %55 = vector.broadcast %3 : f32 to vector<2x128xf32>
    %56 = arith.mulf %55, %35 : vector<2x128xf32>
    %57 = arith.addf %54, %56 : vector<2x128xf32>
    %58 = vector.broadcast %4 : f32 to vector<2x128xf32>
    %59 = arith.mulf %58, %36 : vector<2x128xf32>
    %60 = arith.addf %57, %59 : vector<2x128xf32>
    %61 = vector.broadcast %5 : f32 to vector<2x128xf32>
    %62 = arith.mulf %61, %37 : vector<2x128xf32>
    %63 = arith.addf %60, %62 : vector<2x128xf32>
    %64 = vector.extract_strided_slice %39 {offsets = [0, 256], sizes = [2, 128], strides = [1, 1]} : vector<2x384xf32> to vector<2x128xf32>
    %65 = vector.broadcast %11 : f32 to vector<2x128xf32>
    %66 = arith.addf %64, %65 : vector<2x128xf32>
    %67 = vector.broadcast %6 : f32 to vector<2x128xf32>
    %68 = arith.mulf %67, %35 : vector<2x128xf32>
    %69 = arith.addf %66, %68 : vector<2x128xf32>
    %70 = vector.broadcast %7 : f32 to vector<2x128xf32>
    %71 = arith.mulf %70, %36 : vector<2x128xf32>
    %72 = arith.addf %69, %71 : vector<2x128xf32>
    %73 = vector.broadcast %8 : f32 to vector<2x128xf32>
    %74 = arith.mulf %73, %37 : vector<2x128xf32>
    %75 = arith.addf %72, %74 : vector<2x128xf32>
    %76 = math.tanh %51 : vector<2x128xf32>
    %77 = math.tanh %63 : vector<2x128xf32>
    %78 = math.tanh %75 : vector<2x128xf32>
    %79 = vector.broadcast %12 : f32 to vector<2x128xf32>
    %80 = arith.mulf %79, %76 : vector<2x128xf32>
    %81 = vector.broadcast %13 : f32 to vector<2x128xf32>
    %82 = arith.mulf %81, %77 : vector<2x128xf32>
    %83 = arith.addf %80, %82 : vector<2x128xf32>
    %84 = vector.broadcast %14 : f32 to vector<2x128xf32>
    %85 = arith.mulf %84, %78 : vector<2x128xf32>
    %86 = arith.addf %83, %85 : vector<2x128xf32>
    %c32 = arith.constant 32 : index
    %c0_8 = arith.constant 0 : index
    %87 = vector.load %arg1[%c32, %c0_8] : memref<41x384xf32, #tpu.memory_space<vmem>>, vector<1x128xf32>
    %88 = vector.broadcast %87 : vector<1x128xf32> to vector<2x128xf32>
    %89 = arith.mulf %86, %88 : vector<2x128xf32>
    %90 = arith.addf %38, %89 : vector<2x128xf32>
    %91 = vector.extract_strided_slice %34 {offsets = [2, 0], sizes = [2, 384], strides = [1, 1]} : vector<16x384xf32> to vector<2x384xf32>
    %92 = vector.extract_strided_slice %91 {offsets = [0, 0], sizes = [2, 128], strides = [1, 1]} : vector<2x384xf32> to vector<2x128xf32>
    %93 = vector.broadcast %9 : f32 to vector<2x128xf32>
    %94 = arith.addf %92, %93 : vector<2x128xf32>
    %95 = vector.broadcast %0 : f32 to vector<2x128xf32>
    %96 = arith.mulf %95, %76 : vector<2x128xf32>
    %97 = arith.addf %94, %96 : vector<2x128xf32>
    %98 = vector.broadcast %1 : f32 to vector<2x128xf32>
    %99 = arith.mulf %98, %77 : vector<2x128xf32>
    %100 = arith.addf %97, %99 : vector<2x128xf32>
    %101 = vector.broadcast %2 : f32 to vector<2x128xf32>
    %102 = arith.mulf %101, %78 : vector<2x128xf32>
    %103 = arith.addf %100, %102 : vector<2x128xf32>
    %104 = vector.extract_strided_slice %91 {offsets = [0, 128], sizes = [2, 128], strides = [1, 1]} : vector<2x384xf32> to vector<2x128xf32>
    %105 = vector.broadcast %10 : f32 to vector<2x128xf32>
    %106 = arith.addf %104, %105 : vector<2x128xf32>
    %107 = vector.broadcast %3 : f32 to vector<2x128xf32>
    %108 = arith.mulf %107, %76 : vector<2x128xf32>
    %109 = arith.addf %106, %108 : vector<2x128xf32>
    %110 = vector.broadcast %4 : f32 to vector<2x128xf32>
    %111 = arith.mulf %110, %77 : vector<2x128xf32>
    %112 = arith.addf %109, %111 : vector<2x128xf32>
    %113 = vector.broadcast %5 : f32 to vector<2x128xf32>
    %114 = arith.mulf %113, %78 : vector<2x128xf32>
    %115 = arith.addf %112, %114 : vector<2x128xf32>
    %116 = vector.extract_strided_slice %91 {offsets = [0, 256], sizes = [2, 128], strides = [1, 1]} : vector<2x384xf32> to vector<2x128xf32>
    %117 = vector.broadcast %11 : f32 to vector<2x128xf32>
    %118 = arith.addf %116, %117 : vector<2x128xf32>
    %119 = vector.broadcast %6 : f32 to vector<2x128xf32>
    %120 = arith.mulf %119, %76 : vector<2x128xf32>
    %121 = arith.addf %118, %120 : vector<2x128xf32>
    %122 = vector.broadcast %7 : f32 to vector<2x128xf32>
    %123 = arith.mulf %122, %77 : vector<2x128xf32>
    %124 = arith.addf %121, %123 : vector<2x128xf32>
    %125 = vector.broadcast %8 : f32 to vector<2x128xf32>
    %126 = arith.mulf %125, %78 : vector<2x128xf32>
    %127 = arith.addf %124, %126 : vector<2x128xf32>
    %128 = math.tanh %103 : vector<2x128xf32>
    %129 = math.tanh %115 : vector<2x128xf32>
    %130 = math.tanh %127 : vector<2x128xf32>
    %131 = vector.broadcast %12 : f32 to vector<2x128xf32>
    %132 = arith.mulf %131, %128 : vector<2x128xf32>
    %133 = vector.broadcast %13 : f32 to vector<2x128xf32>
    %134 = arith.mulf %133, %129 : vector<2x128xf32>
    %135 = arith.addf %132, %134 : vector<2x128xf32>
    %136 = vector.broadcast %14 : f32 to vector<2x128xf32>
    %137 = arith.mulf %136, %130 : vector<2x128xf32>
    %138 = arith.addf %135, %137 : vector<2x128xf32>
    %c33 = arith.constant 33 : index
    %c0_9 = arith.constant 0 : index
    %139 = vector.load %arg1[%c33, %c0_9] : memref<41x384xf32, #tpu.memory_space<vmem>>, vector<1x128xf32>
    %140 = vector.broadcast %139 : vector<1x128xf32> to vector<2x128xf32>
    %141 = arith.mulf %138, %140 : vector<2x128xf32>
    %142 = arith.addf %90, %141 : vector<2x128xf32>
    %143 = vector.extract_strided_slice %34 {offsets = [4, 0], sizes = [2, 384], strides = [1, 1]} : vector<16x384xf32> to vector<2x384xf32>
    %144 = vector.extract_strided_slice %143 {offsets = [0, 0], sizes = [2, 128], strides = [1, 1]} : vector<2x384xf32> to vector<2x128xf32>
    %145 = vector.broadcast %9 : f32 to vector<2x128xf32>
    %146 = arith.addf %144, %145 : vector<2x128xf32>
    %147 = vector.broadcast %0 : f32 to vector<2x128xf32>
    %148 = arith.mulf %147, %128 : vector<2x128xf32>
    %149 = arith.addf %146, %148 : vector<2x128xf32>
    %150 = vector.broadcast %1 : f32 to vector<2x128xf32>
    %151 = arith.mulf %150, %129 : vector<2x128xf32>
    %152 = arith.addf %149, %151 : vector<2x128xf32>
    %153 = vector.broadcast %2 : f32 to vector<2x128xf32>
    %154 = arith.mulf %153, %130 : vector<2x128xf32>
    %155 = arith.addf %152, %154 : vector<2x128xf32>
    %156 = vector.extract_strided_slice %143 {offsets = [0, 128], sizes = [2, 128], strides = [1, 1]} : vector<2x384xf32> to vector<2x128xf32>
    %157 = vector.broadcast %10 : f32 to vector<2x128xf32>
    %158 = arith.addf %156, %157 : vector<2x128xf32>
    %159 = vector.broadcast %3 : f32 to vector<2x128xf32>
    %160 = arith.mulf %159, %128 : vector<2x128xf32>
    %161 = arith.addf %158, %160 : vector<2x128xf32>
    %162 = vector.broadcast %4 : f32 to vector<2x128xf32>
    %163 = arith.mulf %162, %129 : vector<2x128xf32>
    %164 = arith.addf %161, %163 : vector<2x128xf32>
    %165 = vector.broadcast %5 : f32 to vector<2x128xf32>
    %166 = arith.mulf %165, %130 : vector<2x128xf32>
    %167 = arith.addf %164, %166 : vector<2x128xf32>
    %168 = vector.extract_strided_slice %143 {offsets = [0, 256], sizes = [2, 128], strides = [1, 1]} : vector<2x384xf32> to vector<2x128xf32>
    %169 = vector.broadcast %11 : f32 to vector<2x128xf32>
    %170 = arith.addf %168, %169 : vector<2x128xf32>
    %171 = vector.broadcast %6 : f32 to vector<2x128xf32>
    %172 = arith.mulf %171, %128 : vector<2x128xf32>
    %173 = arith.addf %170, %172 : vector<2x128xf32>
    %174 = vector.broadcast %7 : f32 to vector<2x128xf32>
    %175 = arith.mulf %174, %129 : vector<2x128xf32>
    %176 = arith.addf %173, %175 : vector<2x128xf32>
    %177 = vector.broadcast %8 : f32 to vector<2x128xf32>
    %178 = arith.mulf %177, %130 : vector<2x128xf32>
    %179 = arith.addf %176, %178 : vector<2x128xf32>
    %180 = math.tanh %155 : vector<2x128xf32>
    %181 = math.tanh %167 : vector<2x128xf32>
    %182 = math.tanh %179 : vector<2x128xf32>
    %183 = vector.broadcast %12 : f32 to vector<2x128xf32>
    %184 = arith.mulf %183, %180 : vector<2x128xf32>
    %185 = vector.broadcast %13 : f32 to vector<2x128xf32>
    %186 = arith.mulf %185, %181 : vector<2x128xf32>
    %187 = arith.addf %184, %186 : vector<2x128xf32>
    %188 = vector.broadcast %14 : f32 to vector<2x128xf32>
    %189 = arith.mulf %188, %182 : vector<2x128xf32>
    %190 = arith.addf %187, %189 : vector<2x128xf32>
    %c34 = arith.constant 34 : index
    %c0_10 = arith.constant 0 : index
    %191 = vector.load %arg1[%c34, %c0_10] : memref<41x384xf32, #tpu.memory_space<vmem>>, vector<1x128xf32>
    %192 = vector.broadcast %191 : vector<1x128xf32> to vector<2x128xf32>
    %193 = arith.mulf %190, %192 : vector<2x128xf32>
    %194 = arith.addf %142, %193 : vector<2x128xf32>
    %195 = vector.extract_strided_slice %34 {offsets = [6, 0], sizes = [2, 384], strides = [1, 1]} : vector<16x384xf32> to vector<2x384xf32>
    %196 = vector.extract_strided_slice %195 {offsets = [0, 0], sizes = [2, 128], strides = [1, 1]} : vector<2x384xf32> to vector<2x128xf32>
    %197 = vector.broadcast %9 : f32 to vector<2x128xf32>
    %198 = arith.addf %196, %197 : vector<2x128xf32>
    %199 = vector.broadcast %0 : f32 to vector<2x128xf32>
    %200 = arith.mulf %199, %180 : vector<2x128xf32>
    %201 = arith.addf %198, %200 : vector<2x128xf32>
    %202 = vector.broadcast %1 : f32 to vector<2x128xf32>
    %203 = arith.mulf %202, %181 : vector<2x128xf32>
    %204 = arith.addf %201, %203 : vector<2x128xf32>
    %205 = vector.broadcast %2 : f32 to vector<2x128xf32>
    %206 = arith.mulf %205, %182 : vector<2x128xf32>
    %207 = arith.addf %204, %206 : vector<2x128xf32>
    %208 = vector.extract_strided_slice %195 {offsets = [0, 128], sizes = [2, 128], strides = [1, 1]} : vector<2x384xf32> to vector<2x128xf32>
    %209 = vector.broadcast %10 : f32 to vector<2x128xf32>
    %210 = arith.addf %208, %209 : vector<2x128xf32>
    %211 = vector.broadcast %3 : f32 to vector<2x128xf32>
    %212 = arith.mulf %211, %180 : vector<2x128xf32>
    %213 = arith.addf %210, %212 : vector<2x128xf32>
    %214 = vector.broadcast %4 : f32 to vector<2x128xf32>
    %215 = arith.mulf %214, %181 : vector<2x128xf32>
    %216 = arith.addf %213, %215 : vector<2x128xf32>
    %217 = vector.broadcast %5 : f32 to vector<2x128xf32>
    %218 = arith.mulf %217, %182 : vector<2x128xf32>
    %219 = arith.addf %216, %218 : vector<2x128xf32>
    %220 = vector.extract_strided_slice %195 {offsets = [0, 256], sizes = [2, 128], strides = [1, 1]} : vector<2x384xf32> to vector<2x128xf32>
    %221 = vector.broadcast %11 : f32 to vector<2x128xf32>
    %222 = arith.addf %220, %221 : vector<2x128xf32>
    %223 = vector.broadcast %6 : f32 to vector<2x128xf32>
    %224 = arith.mulf %223, %180 : vector<2x128xf32>
    %225 = arith.addf %222, %224 : vector<2x128xf32>
    %226 = vector.broadcast %7 : f32 to vector<2x128xf32>
    %227 = arith.mulf %226, %181 : vector<2x128xf32>
    %228 = arith.addf %225, %227 : vector<2x128xf32>
    %229 = vector.broadcast %8 : f32 to vector<2x128xf32>
    %230 = arith.mulf %229, %182 : vector<2x128xf32>
    %231 = arith.addf %228, %230 : vector<2x128xf32>
    %232 = math.tanh %207 : vector<2x128xf32>
    %233 = math.tanh %219 : vector<2x128xf32>
    %234 = math.tanh %231 : vector<2x128xf32>
    %235 = vector.broadcast %12 : f32 to vector<2x128xf32>
    %236 = arith.mulf %235, %232 : vector<2x128xf32>
    %237 = vector.broadcast %13 : f32 to vector<2x128xf32>
    %238 = arith.mulf %237, %233 : vector<2x128xf32>
    %239 = arith.addf %236, %238 : vector<2x128xf32>
    %240 = vector.broadcast %14 : f32 to vector<2x128xf32>
    %241 = arith.mulf %240, %234 : vector<2x128xf32>
    %242 = arith.addf %239, %241 : vector<2x128xf32>
    %c35 = arith.constant 35 : index
    %c0_11 = arith.constant 0 : index
    %243 = vector.load %arg1[%c35, %c0_11] : memref<41x384xf32, #tpu.memory_space<vmem>>, vector<1x128xf32>
    %244 = vector.broadcast %243 : vector<1x128xf32> to vector<2x128xf32>
    %245 = arith.mulf %242, %244 : vector<2x128xf32>
    %246 = arith.addf %194, %245 : vector<2x128xf32>
    %247 = vector.extract_strided_slice %34 {offsets = [8, 0], sizes = [2, 384], strides = [1, 1]} : vector<16x384xf32> to vector<2x384xf32>
    %248 = vector.extract_strided_slice %247 {offsets = [0, 0], sizes = [2, 128], strides = [1, 1]} : vector<2x384xf32> to vector<2x128xf32>
    %249 = vector.broadcast %9 : f32 to vector<2x128xf32>
    %250 = arith.addf %248, %249 : vector<2x128xf32>
    %251 = vector.broadcast %0 : f32 to vector<2x128xf32>
    %252 = arith.mulf %251, %232 : vector<2x128xf32>
    %253 = arith.addf %250, %252 : vector<2x128xf32>
    %254 = vector.broadcast %1 : f32 to vector<2x128xf32>
    %255 = arith.mulf %254, %233 : vector<2x128xf32>
    %256 = arith.addf %253, %255 : vector<2x128xf32>
    %257 = vector.broadcast %2 : f32 to vector<2x128xf32>
    %258 = arith.mulf %257, %234 : vector<2x128xf32>
    %259 = arith.addf %256, %258 : vector<2x128xf32>
    %260 = vector.extract_strided_slice %247 {offsets = [0, 128], sizes = [2, 128], strides = [1, 1]} : vector<2x384xf32> to vector<2x128xf32>
    %261 = vector.broadcast %10 : f32 to vector<2x128xf32>
    %262 = arith.addf %260, %261 : vector<2x128xf32>
    %263 = vector.broadcast %3 : f32 to vector<2x128xf32>
    %264 = arith.mulf %263, %232 : vector<2x128xf32>
    %265 = arith.addf %262, %264 : vector<2x128xf32>
    %266 = vector.broadcast %4 : f32 to vector<2x128xf32>
    %267 = arith.mulf %266, %233 : vector<2x128xf32>
    %268 = arith.addf %265, %267 : vector<2x128xf32>
    %269 = vector.broadcast %5 : f32 to vector<2x128xf32>
    %270 = arith.mulf %269, %234 : vector<2x128xf32>
    %271 = arith.addf %268, %270 : vector<2x128xf32>
    %272 = vector.extract_strided_slice %247 {offsets = [0, 256], sizes = [2, 128], strides = [1, 1]} : vector<2x384xf32> to vector<2x128xf32>
    %273 = vector.broadcast %11 : f32 to vector<2x128xf32>
    %274 = arith.addf %272, %273 : vector<2x128xf32>
    %275 = vector.broadcast %6 : f32 to vector<2x128xf32>
    %276 = arith.mulf %275, %232 : vector<2x128xf32>
    %277 = arith.addf %274, %276 : vector<2x128xf32>
    %278 = vector.broadcast %7 : f32 to vector<2x128xf32>
    %279 = arith.mulf %278, %233 : vector<2x128xf32>
    %280 = arith.addf %277, %279 : vector<2x128xf32>
    %281 = vector.broadcast %8 : f32 to vector<2x128xf32>
    %282 = arith.mulf %281, %234 : vector<2x128xf32>
    %283 = arith.addf %280, %282 : vector<2x128xf32>
    %284 = math.tanh %259 : vector<2x128xf32>
    %285 = math.tanh %271 : vector<2x128xf32>
    %286 = math.tanh %283 : vector<2x128xf32>
    %287 = vector.broadcast %12 : f32 to vector<2x128xf32>
    %288 = arith.mulf %287, %284 : vector<2x128xf32>
    %289 = vector.broadcast %13 : f32 to vector<2x128xf32>
    %290 = arith.mulf %289, %285 : vector<2x128xf32>
    %291 = arith.addf %288, %290 : vector<2x128xf32>
    %292 = vector.broadcast %14 : f32 to vector<2x128xf32>
    %293 = arith.mulf %292, %286 : vector<2x128xf32>
    %294 = arith.addf %291, %293 : vector<2x128xf32>
    %c36 = arith.constant 36 : index
    %c0_12 = arith.constant 0 : index
    %295 = vector.load %arg1[%c36, %c0_12] : memref<41x384xf32, #tpu.memory_space<vmem>>, vector<1x128xf32>
    %296 = vector.broadcast %295 : vector<1x128xf32> to vector<2x128xf32>
    %297 = arith.mulf %294, %296 : vector<2x128xf32>
    %298 = arith.addf %246, %297 : vector<2x128xf32>
    %299 = vector.extract_strided_slice %34 {offsets = [10, 0], sizes = [2, 384], strides = [1, 1]} : vector<16x384xf32> to vector<2x384xf32>
    %300 = vector.extract_strided_slice %299 {offsets = [0, 0], sizes = [2, 128], strides = [1, 1]} : vector<2x384xf32> to vector<2x128xf32>
    %301 = vector.broadcast %9 : f32 to vector<2x128xf32>
    %302 = arith.addf %300, %301 : vector<2x128xf32>
    %303 = vector.broadcast %0 : f32 to vector<2x128xf32>
    %304 = arith.mulf %303, %284 : vector<2x128xf32>
    %305 = arith.addf %302, %304 : vector<2x128xf32>
    %306 = vector.broadcast %1 : f32 to vector<2x128xf32>
    %307 = arith.mulf %306, %285 : vector<2x128xf32>
    %308 = arith.addf %305, %307 : vector<2x128xf32>
    %309 = vector.broadcast %2 : f32 to vector<2x128xf32>
    %310 = arith.mulf %309, %286 : vector<2x128xf32>
    %311 = arith.addf %308, %310 : vector<2x128xf32>
    %312 = vector.extract_strided_slice %299 {offsets = [0, 128], sizes = [2, 128], strides = [1, 1]} : vector<2x384xf32> to vector<2x128xf32>
    %313 = vector.broadcast %10 : f32 to vector<2x128xf32>
    %314 = arith.addf %312, %313 : vector<2x128xf32>
    %315 = vector.broadcast %3 : f32 to vector<2x128xf32>
    %316 = arith.mulf %315, %284 : vector<2x128xf32>
    %317 = arith.addf %314, %316 : vector<2x128xf32>
    %318 = vector.broadcast %4 : f32 to vector<2x128xf32>
    %319 = arith.mulf %318, %285 : vector<2x128xf32>
    %320 = arith.addf %317, %319 : vector<2x128xf32>
    %321 = vector.broadcast %5 : f32 to vector<2x128xf32>
    %322 = arith.mulf %321, %286 : vector<2x128xf32>
    %323 = arith.addf %320, %322 : vector<2x128xf32>
    %324 = vector.extract_strided_slice %299 {offsets = [0, 256], sizes = [2, 128], strides = [1, 1]} : vector<2x384xf32> to vector<2x128xf32>
    %325 = vector.broadcast %11 : f32 to vector<2x128xf32>
    %326 = arith.addf %324, %325 : vector<2x128xf32>
    %327 = vector.broadcast %6 : f32 to vector<2x128xf32>
    %328 = arith.mulf %327, %284 : vector<2x128xf32>
    %329 = arith.addf %326, %328 : vector<2x128xf32>
    %330 = vector.broadcast %7 : f32 to vector<2x128xf32>
    %331 = arith.mulf %330, %285 : vector<2x128xf32>
    %332 = arith.addf %329, %331 : vector<2x128xf32>
    %333 = vector.broadcast %8 : f32 to vector<2x128xf32>
    %334 = arith.mulf %333, %286 : vector<2x128xf32>
    %335 = arith.addf %332, %334 : vector<2x128xf32>
    %336 = math.tanh %311 : vector<2x128xf32>
    %337 = math.tanh %323 : vector<2x128xf32>
    %338 = math.tanh %335 : vector<2x128xf32>
    %339 = vector.broadcast %12 : f32 to vector<2x128xf32>
    %340 = arith.mulf %339, %336 : vector<2x128xf32>
    %341 = vector.broadcast %13 : f32 to vector<2x128xf32>
    %342 = arith.mulf %341, %337 : vector<2x128xf32>
    %343 = arith.addf %340, %342 : vector<2x128xf32>
    %344 = vector.broadcast %14 : f32 to vector<2x128xf32>
    %345 = arith.mulf %344, %338 : vector<2x128xf32>
    %346 = arith.addf %343, %345 : vector<2x128xf32>
    %c37 = arith.constant 37 : index
    %c0_13 = arith.constant 0 : index
    %347 = vector.load %arg1[%c37, %c0_13] : memref<41x384xf32, #tpu.memory_space<vmem>>, vector<1x128xf32>
    %348 = vector.broadcast %347 : vector<1x128xf32> to vector<2x128xf32>
    %349 = arith.mulf %346, %348 : vector<2x128xf32>
    %350 = arith.addf %298, %349 : vector<2x128xf32>
    %351 = vector.extract_strided_slice %34 {offsets = [12, 0], sizes = [2, 384], strides = [1, 1]} : vector<16x384xf32> to vector<2x384xf32>
    %352 = vector.extract_strided_slice %351 {offsets = [0, 0], sizes = [2, 128], strides = [1, 1]} : vector<2x384xf32> to vector<2x128xf32>
    %353 = vector.broadcast %9 : f32 to vector<2x128xf32>
    %354 = arith.addf %352, %353 : vector<2x128xf32>
    %355 = vector.broadcast %0 : f32 to vector<2x128xf32>
    %356 = arith.mulf %355, %336 : vector<2x128xf32>
    %357 = arith.addf %354, %356 : vector<2x128xf32>
    %358 = vector.broadcast %1 : f32 to vector<2x128xf32>
    %359 = arith.mulf %358, %337 : vector<2x128xf32>
    %360 = arith.addf %357, %359 : vector<2x128xf32>
    %361 = vector.broadcast %2 : f32 to vector<2x128xf32>
    %362 = arith.mulf %361, %338 : vector<2x128xf32>
    %363 = arith.addf %360, %362 : vector<2x128xf32>
    %364 = vector.extract_strided_slice %351 {offsets = [0, 128], sizes = [2, 128], strides = [1, 1]} : vector<2x384xf32> to vector<2x128xf32>
    %365 = vector.broadcast %10 : f32 to vector<2x128xf32>
    %366 = arith.addf %364, %365 : vector<2x128xf32>
    %367 = vector.broadcast %3 : f32 to vector<2x128xf32>
    %368 = arith.mulf %367, %336 : vector<2x128xf32>
    %369 = arith.addf %366, %368 : vector<2x128xf32>
    %370 = vector.broadcast %4 : f32 to vector<2x128xf32>
    %371 = arith.mulf %370, %337 : vector<2x128xf32>
    %372 = arith.addf %369, %371 : vector<2x128xf32>
    %373 = vector.broadcast %5 : f32 to vector<2x128xf32>
    %374 = arith.mulf %373, %338 : vector<2x128xf32>
    %375 = arith.addf %372, %374 : vector<2x128xf32>
    %376 = vector.extract_strided_slice %351 {offsets = [0, 256], sizes = [2, 128], strides = [1, 1]} : vector<2x384xf32> to vector<2x128xf32>
    %377 = vector.broadcast %11 : f32 to vector<2x128xf32>
    %378 = arith.addf %376, %377 : vector<2x128xf32>
    %379 = vector.broadcast %6 : f32 to vector<2x128xf32>
    %380 = arith.mulf %379, %336 : vector<2x128xf32>
    %381 = arith.addf %378, %380 : vector<2x128xf32>
    %382 = vector.broadcast %7 : f32 to vector<2x128xf32>
    %383 = arith.mulf %382, %337 : vector<2x128xf32>
    %384 = arith.addf %381, %383 : vector<2x128xf32>
    %385 = vector.broadcast %8 : f32 to vector<2x128xf32>
    %386 = arith.mulf %385, %338 : vector<2x128xf32>
    %387 = arith.addf %384, %386 : vector<2x128xf32>
    %388 = math.tanh %363 : vector<2x128xf32>
    %389 = math.tanh %375 : vector<2x128xf32>
    %390 = math.tanh %387 : vector<2x128xf32>
    %391 = vector.broadcast %12 : f32 to vector<2x128xf32>
    %392 = arith.mulf %391, %388 : vector<2x128xf32>
    %393 = vector.broadcast %13 : f32 to vector<2x128xf32>
    %394 = arith.mulf %393, %389 : vector<2x128xf32>
    %395 = arith.addf %392, %394 : vector<2x128xf32>
    %396 = vector.broadcast %14 : f32 to vector<2x128xf32>
    %397 = arith.mulf %396, %390 : vector<2x128xf32>
    %398 = arith.addf %395, %397 : vector<2x128xf32>
    %c38 = arith.constant 38 : index
    %c0_14 = arith.constant 0 : index
    %399 = vector.load %arg1[%c38, %c0_14] : memref<41x384xf32, #tpu.memory_space<vmem>>, vector<1x128xf32>
    %400 = vector.broadcast %399 : vector<1x128xf32> to vector<2x128xf32>
    %401 = arith.mulf %398, %400 : vector<2x128xf32>
    %402 = arith.addf %350, %401 : vector<2x128xf32>
    %403 = vector.extract_strided_slice %34 {offsets = [14, 0], sizes = [2, 384], strides = [1, 1]} : vector<16x384xf32> to vector<2x384xf32>
    %404 = vector.extract_strided_slice %403 {offsets = [0, 0], sizes = [2, 128], strides = [1, 1]} : vector<2x384xf32> to vector<2x128xf32>
    %405 = vector.broadcast %9 : f32 to vector<2x128xf32>
    %406 = arith.addf %404, %405 : vector<2x128xf32>
    %407 = vector.broadcast %0 : f32 to vector<2x128xf32>
    %408 = arith.mulf %407, %388 : vector<2x128xf32>
    %409 = arith.addf %406, %408 : vector<2x128xf32>
    %410 = vector.broadcast %1 : f32 to vector<2x128xf32>
    %411 = arith.mulf %410, %389 : vector<2x128xf32>
    %412 = arith.addf %409, %411 : vector<2x128xf32>
    %413 = vector.broadcast %2 : f32 to vector<2x128xf32>
    %414 = arith.mulf %413, %390 : vector<2x128xf32>
    %415 = arith.addf %412, %414 : vector<2x128xf32>
    %416 = vector.extract_strided_slice %403 {offsets = [0, 128], sizes = [2, 128], strides = [1, 1]} : vector<2x384xf32> to vector<2x128xf32>
    %417 = vector.broadcast %10 : f32 to vector<2x128xf32>
    %418 = arith.addf %416, %417 : vector<2x128xf32>
    %419 = vector.broadcast %3 : f32 to vector<2x128xf32>
    %420 = arith.mulf %419, %388 : vector<2x128xf32>
    %421 = arith.addf %418, %420 : vector<2x128xf32>
    %422 = vector.broadcast %4 : f32 to vector<2x128xf32>
    %423 = arith.mulf %422, %389 : vector<2x128xf32>
    %424 = arith.addf %421, %423 : vector<2x128xf32>
    %425 = vector.broadcast %5 : f32 to vector<2x128xf32>
    %426 = arith.mulf %425, %390 : vector<2x128xf32>
    %427 = arith.addf %424, %426 : vector<2x128xf32>
    %428 = vector.extract_strided_slice %403 {offsets = [0, 256], sizes = [2, 128], strides = [1, 1]} : vector<2x384xf32> to vector<2x128xf32>
    %429 = vector.broadcast %11 : f32 to vector<2x128xf32>
    %430 = arith.addf %428, %429 : vector<2x128xf32>
    %431 = vector.broadcast %6 : f32 to vector<2x128xf32>
    %432 = arith.mulf %431, %388 : vector<2x128xf32>
    %433 = arith.addf %430, %432 : vector<2x128xf32>
    %434 = vector.broadcast %7 : f32 to vector<2x128xf32>
    %435 = arith.mulf %434, %389 : vector<2x128xf32>
    %436 = arith.addf %433, %435 : vector<2x128xf32>
    %437 = vector.broadcast %8 : f32 to vector<2x128xf32>
    %438 = arith.mulf %437, %390 : vector<2x128xf32>
    %439 = arith.addf %436, %438 : vector<2x128xf32>
    %440 = math.tanh %415 : vector<2x128xf32>
    %441 = math.tanh %427 : vector<2x128xf32>
    %442 = math.tanh %439 : vector<2x128xf32>
    %443 = vector.broadcast %12 : f32 to vector<2x128xf32>
    %444 = arith.mulf %443, %440 : vector<2x128xf32>
    %445 = vector.broadcast %13 : f32 to vector<2x128xf32>
    %446 = arith.mulf %445, %441 : vector<2x128xf32>
    %447 = arith.addf %444, %446 : vector<2x128xf32>
    %448 = vector.broadcast %14 : f32 to vector<2x128xf32>
    %449 = arith.mulf %448, %442 : vector<2x128xf32>
    %450 = arith.addf %447, %449 : vector<2x128xf32>
    %c39 = arith.constant 39 : index
    %c0_15 = arith.constant 0 : index
    %451 = vector.load %arg1[%c39, %c0_15] : memref<41x384xf32, #tpu.memory_space<vmem>>, vector<1x128xf32>
    %452 = vector.broadcast %451 : vector<1x128xf32> to vector<2x128xf32>
    %453 = arith.mulf %450, %452 : vector<2x128xf32>
    %454 = arith.addf %402, %453 : vector<2x128xf32>
    %c40 = arith.constant 40 : index
    %c0_16 = arith.constant 0 : index
    %455 = vector.load %arg1[%c40, %c0_16] : memref<41x384xf32, #tpu.memory_space<vmem>>, vector<1x128xf32>
    %456 = vector.broadcast %455 : vector<1x128xf32> to vector<2x128xf32>
    %457 = arith.addf %454, %456 : vector<2x128xf32>
    %458 = tpu.iota {dimensions = array<i32: 1>} : vector<2x128xi32>
    %c32_i32 = arith.constant 32 : i32
    %459 = vector.broadcast %c32_i32 : i32 to vector<2x128xi32>
    %460 = arith.cmpi eq, %458, %459 : vector<2x128xi32>
    %461 = arith.select %460, %440, %457 : vector<2x128xi1>, vector<2x128xf32>
    %c33_i32 = arith.constant 33 : i32
    %462 = vector.broadcast %c33_i32 : i32 to vector<2x128xi32>
    %463 = arith.cmpi eq, %458, %462 : vector<2x128xi32>
    %464 = arith.select %463, %441, %461 : vector<2x128xi1>, vector<2x128xf32>
    %c34_i32 = arith.constant 34 : i32
    %465 = vector.broadcast %c34_i32 : i32 to vector<2x128xi32>
    %466 = arith.cmpi eq, %458, %465 : vector<2x128xi32>
    %467 = arith.select %466, %442, %464 : vector<2x128xi1>, vector<2x128xf32>
    %c0_17 = arith.constant 0 : index
    %c0_18 = arith.constant 0 : index
    %468 = vector.load %arg3[%c0_17, %c0_18] : memref<2x128xf32, #tpu.memory_space<vmem>>, vector<2x128xf32>
    tpu.vector_store %arg3[%c0_17, %c0_18], %467 {strides = array<i32>} : memref<2x128xf32, #tpu.memory_space<vmem>>, vector<2x128xf32>,
    return
  }
}

</mosaic_0001>

<llo_original>
// kernel: tpu_custom_call.1
$region0: #{tpu_custom_call.1}
  #allocation0 [shape = 'u32[]', space=smem, size = 0x4, offset = 0x4, fixed_abs, tag = 'smem constant byte address 0x4 - core index']
  #allocation1 [shape = 'u32[144,128]{1,0:T(1,128)}', space=vmem, size = 0x12000, scoped, tag = 'internal scratch']
  %s0 = inlined_call_operand.hbm [shape: f32[16,32], index: 0, kind: input, shape index: {}]
  %s1 = inlined_call_operand.hbm [shape: f32[41,384], index: 1, kind: input, shape index: {}]
  %s2 = inlined_call_operand.vmem [shape: f32[15], index: 2, kind: input, shape index: {}]
  %s3 = inlined_call_operand.hbm [shape: f32[2,128], index: 3, kind: output, shape index: {}]
  %s4 = sld [smem:[#allocation0]]
  $region34: #{tpu_custom_call.1} parent=0
    _
  %s6 = ssub.s32 1, %s4
  %s7 = scalar_select 0, %s6, %s4
  $region1: #{tpu_custom_call.1} parent=0
    #allocation2 [shape = 'u8[8192]{0}', space=vmem, size = 0x2000, scoped, tag = 'input window, operand 0, single buffered']
    #allocation3 [shape = 's32[1]{0}', space=sflag, size = 0x4, scoped, tag = 'scoped memory for tpu_custom_call.1']
    #allocation4 [shape = 's32[1]{0}', space=sflag, size = 0x4, scoped, tag = 'scoped memory for tpu_custom_call.1']
    #allocation5 [shape = 's32[1]{0}', space=sflag, size = 0x4, scoped, tag = 'scoped memory for tpu_custom_call.1']
    #allocation6 [shape = 'u8[73728]{0}', space=vmem, size = 0x12000, scoped, tag = 'input window, operand 1, single buffered']
    #allocation7 [shape = 's32[1]{0}', space=sflag, size = 0x4, scoped, tag = 'scoped memory for tpu_custom_call.1']
    #allocation8 [shape = 'u8[512]{0}', space=smem, size = 0x200, scoped, tag = 'input window, operand 2, single buffered']
    #allocation9 [shape = 'u8[1024]{0}', space=vmem, size = 0x400, scoped, tag = 'output window, operand 0, single buffered']
    %8 = vsyncpa [#allocation3], 0
    %9 = vsyncpa [#allocation7], 0
    %10 = vsyncpa [#allocation5], 0
    %11 = vsyncpa [#allocation4], 0
    // Predicated region
    $region2: #{tpu_custom_call.1} parent=1 // pred_check
      _
    $region3: #{tpu_custom_call.1} parent=1 // pred_check_branch
      %13 = sbr.rel (0) target = $region5
    $region4: #{tpu_custom_call.1} parent=1 // pred_region
      %s15 = ssub.s32 256, 256
      %16 = vsyncadd [#allocation3], %s15
      %s17 = sshll.u32 [#allocation2], 4
      %s18 = int_to_ptr.vmem [resolvable:$true] %s17
      %23 = dma.hbm_to_vmem [thread:$0]  %s0, 256, %s18, [#allocation3], 128, 128, 8
    $region5: #{tpu_custom_call.1} parent=1 // pred_fallthru
      _
    // Predicated region
    $region6: #{tpu_custom_call.1} parent=1 // pred_check
      _
    $region7: #{tpu_custom_call.1} parent=1 // pred_check_branch
      %25 = sbr.rel (0) target = $region9
    $region8: #{tpu_custom_call.1} parent=1 // pred_region
      %s27 = ssub.s32 2304, 2304
      %28 = vsyncadd [#allocation7], %s27
      %s29 = sshll.u32 [#allocation6], 4
      %s30 = int_to_ptr.vmem [resolvable:$true] %s29
      %35 = dma.hbm_to_vmem [thread:$0]  %s1, 2304, %s30, [#allocation7], 384, 384, 24
    $region9: #{tpu_custom_call.1} parent=1 // pred_fallthru
      _
    // Predicated region
    $region10: #{tpu_custom_call.1} parent=1 // pred_check
      _
    $region11: #{tpu_custom_call.1} parent=1 // pred_check_branch
      %37 = sbr.rel (0) target = $region13
    $region12: #{tpu_custom_call.1} parent=1 // pred_region
      %s39 = ssub.s32 16, 16
      %40 = vsyncadd [#allocation5], %s39
      %s42 = sshll.u32 %s2, 4
      %s43 = int_to_ptr.vmem [resolvable:$true] %s42
      %45 = dma.vmem_to_smem %s43, 16, [#allocation8], [#allocation5]
    $region13: #{tpu_custom_call.1} parent=1 // pred_fallthru
      _
    // Predicated region
    $region14: #{tpu_custom_call.1} parent=1 // pred_check
      _
    $region15: #{tpu_custom_call.1} parent=1 // pred_check_branch
      %47 = sbr.rel (0) target = $region17
    $region16: #{tpu_custom_call.1} parent=1 // pred_region
      %48 = dma.done [#allocation3], 256
    $region17: #{tpu_custom_call.1} parent=1 // pred_fallthru
      _
    // Predicated region
    $region18: #{tpu_custom_call.1} parent=1 // pred_check
      _
    $region19: #{tpu_custom_call.1} parent=1 // pred_check_branch
      %50 = sbr.rel (0) target = $region21
    $region20: #{tpu_custom_call.1} parent=1 // pred_region
      %51 = dma.done [#allocation7], 2304
    $region21: #{tpu_custom_call.1} parent=1 // pred_fallthru
      _
    // Predicated region
    $region22: #{tpu_custom_call.1} parent=1 // pred_check
      _
    $region23: #{tpu_custom_call.1} parent=1 // pred_check_branch
      %53 = sbr.rel (0) target = $region25
    $region24: #{tpu_custom_call.1} parent=1 // pred_region
      %54 = dma.done [#allocation5], 16
    $region25: #{tpu_custom_call.1} parent=1 // pred_fallthru
      _
    %55 = sfence
    %s56 = sld [smem:[#allocation8]]
    %s57 = sld [smem:[#allocation8 + $0x1]]
    %s58 = sld [smem:[#allocation8 + $0x2]]
    %s59 = sld [smem:[#allocation8 + $0x3]]
    %s60 = sld [smem:[#allocation8 + $0x4]]
    %s61 = sld [smem:[#allocation8 + $0x5]]
    %s62 = sld [smem:[#allocation8 + $0x6]]
    %s63 = sld [smem:[#allocation8 + $0x7]]
    %s64 = sld [smem:[#allocation8 + $0x8]]
    %s65 = sld [smem:[#allocation8 + $0x9]]
    %s66 = sld [smem:[#allocation8 + $0xa]]
    %s67 = sld [smem:[#allocation8 + $0xb]]
    %s68 = sld [smem:[#allocation8 + $0xc]]
    %s69 = sld [smem:[#allocation8 + $0xd]]
    %s70 = sld [smem:[#allocation8 + $0xe]]
    %v71 = vld [vmem:[#allocation2] sm:$0xff]
    %v72 = vld [vmem:[#allocation2 + $0x8] sm:$0xff]
    %v74 = vrot.slane %v72, 7
    %v77 = vrot.slane %v71, 7
    %v79 = vrot.slane %v72, 6
    %v81 = vrot.slane %v71, 6
    %v83 = vrot.slane %v72, 5
    %v85 = vrot.slane %v71, 5
    %v87 = vrot.slane %v72, 4
    %v89 = vrot.slane %v71, 4
    %v91 = vrot.slane %v72, 3
    %v93 = vrot.slane %v71, 3
    %v95 = vrot.slane %v72, 2
    %v97 = vrot.slane %v71, 2
    %v99 = vrot.slane %v72, 1
    %v101 = vrot.slane %v71, 1
    %vm103 = vcmask 1040384
    %v104 = vsel %vm103, %v71, %v74
    %vm105 = vcmask 1041408
    %v106 = vsel %vm105, %v104, %v77
    %vm107 = vcmask 1042432
    %v108 = vsel %vm107, %v106, %v79
    %vm109 = vcmask 1043456
    %v110 = vsel %vm109, %v108, %v81
    %vm111 = vcmask 1044480
    %v112 = vsel %vm111, %v110, %v83
    %vm113 = vcmask 1045504
    %v114 = vsel %vm113, %v112, %v85
    %vm115 = vcmask 1046528
    %v116 = vsel %vm115, %v114, %v87
    %v117 = vsel %vm103, %v89, %v91
    %v118 = vsel %vm105, %v117, %v93
    %v119 = vsel %vm107, %v118, %v95
    %v120 = vsel %vm109, %v119, %v97
    %v121 = vsel %vm111, %v120, %v99
    %v122 = vsel %vm113, %v121, %v101
    %v123 = vsel %vm115, %v122, %v72
    %v124 = vld [vmem:[#allocation6] sm:$0xff]
    %v125 = vld [vmem:[#allocation6 + $0x8] sm:$0xff]
    %v126 = vld [vmem:[#allocation6 + $0x10] sm:$0xff]
    %v127 = vld [vmem:[#allocation6 + $0x18] sm:$0xff]
    %v128 = vld [vmem:[#allocation6 + $0x20] sm:$0xff]
    %v129 = vld [vmem:[#allocation6 + $0x28] sm:$0xff]
    %v130 = vld [vmem:[#allocation6 + $0x30] sm:$0xff]
    %v131 = vld [vmem:[#allocation6 + $0x38] sm:$0xff]
    %v132 = vld [vmem:[#allocation6 + $0x40] sm:$0xff]
    %v133 = vld [vmem:[#allocation6 + $0x48] sm:$0xff]
    %v134 = vld [vmem:[#allocation6 + $0x50] sm:$0xff]
    %v135 = vld [vmem:[#allocation6 + $0x58] sm:$0xff]
    %vm136 = vcmask 261120
    %v138 = vsel %vm136, %v116, 0
    %v141 = vsel %vm136, %v123, 0
    %143 = vmatprep.subr.mxu0 0.0
    %144 = vmatpush1.msra.mxu0 0.0
    %145 = vmatprep.subr.mxu0 0.0
    %146 = vmatpush1.msra.mxu0 0.0
    %147 = vmatprep.subr.mxu0 0.0
    %148 = vmatpush1.msra.mxu0 0.0
    %149 = vmatprep.subr.mxu0 0.0
    %150 = vmatpush1.msra.mxu0 0.0
    %151 = vmatprep.subr.mxu0 0.0
    %152 = vmatpush1.msra.mxu0 0.0
    %153 = vmatprep.subr.mxu0 0.0
    %154 = vmatpush1.msra.mxu0 0.0
    %155 = vmatprep.subr.mxu0 0.0
    %156 = vmatpush1.msra.mxu0 0.0
    %157 = vmatprep.subr.mxu0 0.0
    %158 = vmatpush1.msra.mxu0 0.0
    %159 = vmatprep.subr.mxu0 0.0
    %160 = vmatpush1.msra.mxu0 0.0
    %161 = vmatprep.subr.mxu0 0.0
    %162 = vmatpush1.msra.mxu0 0.0
    %163 = vmatprep.subr.mxu0 0.0
    %164 = vmatpush1.msra.mxu0 0.0
    %165 = vmatprep.subr.mxu0 0.0
    %166 = vmatpush1.msra.mxu0 0.0
    %167 = vmatprep.subr.mxu0 %v134
    %168 = vmatpush1.msra.mxu0 %v133
    %169 = vmatprep.subr.mxu0 %v131
    %170 = vmatpush1.msra.mxu0 %v130
    %171 = vmatprep.subr.mxu0 %v128
    %172 = vmatpush1.msra.mxu0 %v127
    %173 = vmatprep.subr.mxu0 %v125
    %174 = vmatpush1.msra.mxu0 %v124
    %175 = vmatprep.subr.mxu0 0.0
    %176 = vmatpush2.msra.mxu0 0.0
    %177 = vmatprep.subr.mxu0 0.0
    %178 = vmatpush2.msra.mxu0 0.0
    %179 = vmatprep.subr.mxu0 0.0
    %180 = vmatpush2.msra.mxu0 0.0
    %181 = vmatprep.subr.mxu0 0.0
    %182 = vmatpush2.msra.mxu0 0.0
    %183 = vmatprep.subr.mxu0 0.0
    %184 = vmatpush2.msra.mxu0 0.0
    %185 = vmatprep.subr.mxu0 0.0
    %186 = vmatpush2.msra.mxu0 0.0
    %187 = vmatprep.subr.mxu0 0.0
    %188 = vmatpush2.msra.mxu0 0.0
    %189 = vmatprep.subr.mxu0 0.0
    %190 = vmatpush2.msra.mxu0 0.0
    %191 = vmatprep.subr.mxu0 0.0
    %192 = vmatpush2.msra.mxu0 0.0
    %193 = vmatprep.subr.mxu0 0.0
    %194 = vmatpush2.msra.mxu0 0.0
    %195 = vmatprep.subr.mxu0 0.0
    %196 = vmatpush2.msra.mxu0 0.0
    %197 = vmatprep.subr.mxu0 0.0
    %198 = vmatpush2.msra.mxu0 0.0
    %199 = vmatprep.subr.mxu0 0.0
    %200 = vmatpush2.msra.mxu0 0.0
    %201 = vmatprep.subr.mxu0 0.0
    %202 = vmatpush2.msra.mxu0 0.0
    %203 = vmatprep.subr.mxu0 0.0
    %204 = vmatpush2.msra.mxu0 0.0
    %205 = vmatprep.subr.mxu0 0.0
    %206 = vmatpush2.msra.mxu0 0.0
    %207 = vmatprep.mubr.f32.mxu0 0.0
    %208 = vmatmul.mubr.f32.gmra.mxu0 %v138
    %v209 = vpop.f32.mrf.mxu0
    %v210 = vadd.f32 0.0, %v209
    %v211 = vpop.f32.mrf.mxu0
    %v212 = vadd.f32 0.0, %v211
    %213 = vmatprep.mubr.f32.mxu0 0.0
    %214 = vmatmul.mubr.f32.gmra.mxu0 %v141
    %v215 = vpop.f32.mrf.mxu0
    %v216 = vadd.f32 0.0, %v215
    %v217 = vpop.f32.mrf.mxu0
    %v218 = vadd.f32 0.0, %v217
    %219 = vdwg.mxu0
    %220 = vmatprep.subr.mxu0 0.0
    %221 = vmatpush1.msra.mxu0 0.0
    %222 = vmatprep.subr.mxu0 0.0
    %223 = vmatpush1.msra.mxu0 0.0
    %224 = vmatprep.subr.mxu0 0.0
    %225 = vmatpush1.msra.mxu0 0.0
    %226 = vmatprep.subr.mxu0 0.0
    %227 = vmatpush1.msra.mxu0 0.0
    %228 = vmatprep.subr.mxu0 0.0
    %229 = vmatpush1.msra.mxu0 0.0
    %230 = vmatprep.subr.mxu0 0.0
    %231 = vmatpush1.msra.mxu0 0.0
    %232 = vmatprep.subr.mxu0 0.0
    %233 = vmatpush1.msra.mxu0 0.0
    %234 = vmatprep.subr.mxu0 0.0
    %235 = vmatpush1.msra.mxu0 0.0
    %236 = vmatprep.subr.mxu0 0.0
    %237 = vmatpush1.msra.mxu0 0.0
    %238 = vmatprep.subr.mxu0 0.0
    %239 = vmatpush1.msra.mxu0 0.0
    %240 = vmatprep.subr.mxu0 0.0
    %241 = vmatpush1.msra.mxu0 0.0
    %242 = vmatprep.subr.mxu0 0.0
    %243 = vmatpush1.msra.mxu0 0.0
    %244 = vmatprep.subr.mxu0 0.0
    %245 = vmatpush1.msra.mxu0 %v135
    %246 = vmatprep.subr.mxu0 0.0
    %247 = vmatpush1.msra.mxu0 %v132
    %248 = vmatprep.subr.mxu0 0.0
    %249 = vmatpush1.msra.mxu0 %v129
    %250 = vmatprep.subr.mxu0 0.0
    %251 = vmatpush1.msra.mxu0 %v126
    %252 = vmatprep.subr.mxu0 0.0
    %253 = vmatpush2.msra.mxu0 0.0
    %254 = vmatprep.subr.mxu0 0.0
    %255 = vmatpush2.msra.mxu0 0.0
    %256 = vmatprep.subr.mxu0 0.0
    %257 = vmatpush2.msra.mxu0 0.0
    %258 = vmatprep.subr.mxu0 0.0
    %259 = vmatpush2.msra.mxu0 0.0
    %260 = vmatprep.subr.mxu0 0.0
    %261 = vmatpush2.msra.mxu0 0.0
    %262 = vmatprep.subr.mxu0 0.0
    %263 = vmatpush2.msra.mxu0 0.0
    %264 = vmatprep.subr.mxu0 0.0
    %265 = vmatpush2.msra.mxu0 0.0
    %266 = vmatprep.subr.mxu0 0.0
    %267 = vmatpush2.msra.mxu0 0.0
    %268 = vmatprep.subr.mxu0 0.0
    %269 = vmatpush2.msra.mxu0 0.0
    %270 = vmatprep.subr.mxu0 0.0
    %271 = vmatpush2.msra.mxu0 0.0
    %272 = vmatprep.subr.mxu0 0.0
    %273 = vmatpush2.msra.mxu0 0.0
    %274 = vmatprep.subr.mxu0 0.0
    %275 = vmatpush2.msra.mxu0 0.0
    %276 = vmatprep.subr.mxu0 0.0
    %277 = vmatpush2.msra.mxu0 0.0
    %278 = vmatprep.subr.mxu0 0.0
    %279 = vmatpush2.msra.mxu0 0.0
    %280 = vmatprep.subr.mxu0 0.0
    %281 = vmatpush2.msra.mxu0 0.0
    %282 = vmatprep.subr.mxu0 0.0
    %283 = vmatpush2.msra.mxu0 0.0
    %284 = vmatprep.mubr.f32.mxu0 0.0
    %285 = vmatmul.mubr.f32.gmra.mxu0 %v138
    %v286 = vpop.f32.mrf.mxu0
    %v287 = vadd.f32 0.0, %v286
    %v288 = vpop.f32.mrf.mxu0
    %289 = vmatprep.mubr.f32.mxu0 0.0
    %290 = vmatmul.mubr.f32.gmra.mxu0 %v141
    %v291 = vpop.f32.mrf.mxu0
    %v292 = vadd.f32 0.0, %v291
    %v293 = vpop.f32.mrf.mxu0
    %294 = vdwg.mxu0
    %v295 = vstv %s65
    %v296 = vadd.f32 %v210, %v295
    %v297 = vstv %s56
    %v298 = vmul.f32 %v297, 0.0
    %v299 = vadd.f32 %v296, %v298
    %v300 = vstv %s57
    %v301 = vmul.f32 %v300, 0.0
    %v302 = vadd.f32 %v299, %v301
    %v303 = vstv %s58
    %v304 = vmul.f32 %v303, 0.0
    %v305 = vadd.f32 %v302, %v304
    %v306 = vstv %s66
    %v307 = vadd.f32 %v212, %v306
    %v308 = vstv %s59
    %v309 = vmul.f32 %v308, 0.0
    %v310 = vadd.f32 %v307, %v309
    %v311 = vstv %s60
    %v312 = vmul.f32 %v311, 0.0
    %v313 = vadd.f32 %v310, %v312
    %v314 = vstv %s61
    %v315 = vmul.f32 %v314, 0.0
    %v316 = vadd.f32 %v313, %v315
    %v317 = vstv %s67
    %v318 = vadd.f32 %v287, %v317
    %v319 = vstv %s62
    %v320 = vmul.f32 %v319, 0.0
    %v321 = vadd.f32 %v318, %v320
    %v322 = vstv %s63
    %v323 = vmul.f32 %v322, 0.0
    %v324 = vadd.f32 %v321, %v323
    %v325 = vstv %s64
    %v326 = vmul.f32 %v325, 0.0
    %v327 = vadd.f32 %v324, %v326
    %v328 = vtanh.pop %v305
    %v329 = vtanh.pop %v316
    %v330 = vtanh.pop %v327
    %v331 = vstv %s68
    %v332 = vmul.f32 %v331, %v328
    %v333 = vstv %s69
    %v334 = vmul.f32 %v333, %v329
    %v335 = vadd.f32 %v332, %v334
    %v336 = vstv %s70
    %v337 = vmul.f32 %v336, %v330
    %v338 = vadd.f32 %v335, %v337
    %v339 = vld [vmem:[#allocation6 + $0x60] ss:$0 sm:$0xff]
    %v340 = vmul.f32 %v338, %v339
    %v341 = vadd.f32 %v340, 0.0
    %v342 = vmul.f32 %v297, %v328
    %v344 = vrot.slane %v342, 6
    %v346 = vadd.f32 %v296, %v344
    %v347 = vmul.f32 %v300, %v329
    %v349 = vrot.slane %v347, 6
    %v351 = vadd.f32 %v346, %v349
    %v352 = vmul.f32 %v303, %v330
    %v354 = vrot.slane %v352, 6
    %v356 = vadd.f32 %v351, %v354
    %v357 = vmul.f32 %v308, %v328
    %v359 = vrot.slane %v357, 6
    %v361 = vadd.f32 %v307, %v359
    %v362 = vmul.f32 %v311, %v329
    %v364 = vrot.slane %v362, 6
    %v366 = vadd.f32 %v361, %v364
    %v367 = vmul.f32 %v314, %v330
    %v369 = vrot.slane %v367, 6
    %v371 = vadd.f32 %v366, %v369
    %v372 = vmul.f32 %v319, %v328
    %v374 = vrot.slane %v372, 6
    %v376 = vadd.f32 %v318, %v374
    %v377 = vmul.f32 %v322, %v329
    %v379 = vrot.slane %v377, 6
    %v381 = vadd.f32 %v376, %v379
    %v382 = vmul.f32 %v325, %v330
    %v384 = vrot.slane %v382, 6
    %v386 = vadd.f32 %v381, %v384
    %v387 = vtanh.pop %v356
    %v388 = vtanh.pop %v371
    %v389 = vtanh.pop %v386
    %v390 = vmul.f32 %v331, %v387
    %v391 = vmul.f32 %v333, %v388
    %v392 = vadd.f32 %v390, %v391
    %v393 = vmul.f32 %v336, %v389
    %v394 = vadd.f32 %v392, %v393
    %v395 = vld [vmem:[#allocation6 + $0x61] ss:$0 sm:$0xff]
    %v396 = vmul.f32 %v394, %v395
    %v398 = vrot.slane %v396, 2
    %v400 = vadd.f32 %v341, %v398
    %v401 = vmul.f32 %v297, %v387
    %v403 = vrot.slane %v401, 6
    %v405 = vadd.f32 %v296, %v403
    %v406 = vmul.f32 %v300, %v388
    %v408 = vrot.slane %v406, 6
    %v410 = vadd.f32 %v405, %v408
    %v411 = vmul.f32 %v303, %v389
    %v413 = vrot.slane %v411, 6
    %v415 = vadd.f32 %v410, %v413
    %v416 = vmul.f32 %v308, %v387
    %v418 = vrot.slane %v416, 6
    %v420 = vadd.f32 %v307, %v418
    %v421 = vmul.f32 %v311, %v388
    %v423 = vrot.slane %v421, 6
    %v425 = vadd.f32 %v420, %v423
    %v426 = vmul.f32 %v314, %v389
    %v428 = vrot.slane %v426, 6
    %v430 = vadd.f32 %v425, %v428
    %v431 = vmul.f32 %v319, %v387
    %v433 = vrot.slane %v431, 6
    %v435 = vadd.f32 %v318, %v433
    %v436 = vmul.f32 %v322, %v388
    %v438 = vrot.slane %v436, 6
    %v440 = vadd.f32 %v435, %v438
    %v441 = vmul.f32 %v325, %v389
    %v443 = vrot.slane %v441, 6
    %v445 = vadd.f32 %v440, %v443
    %v446 = vtanh.pop %v415
    %v447 = vtanh.pop %v430
    %v448 = vtanh.pop %v445
    %v449 = vmul.f32 %v331, %v446
    %v450 = vmul.f32 %v333, %v447
    %v451 = vadd.f32 %v449, %v450
    %v452 = vmul.f32 %v336, %v448
    %v453 = vadd.f32 %v451, %v452
    %v454 = vld [vmem:[#allocation6 + $0x62] ss:$0 sm:$0xff]
    %v455 = vmul.f32 %v453, %v454
    %v457 = vrot.slane %v455, 4
    %v459 = vadd.f32 %v400, %v457
    %v460 = vmul.f32 %v297, %v446
    %v462 = vrot.slane %v460, 6
    %v464 = vadd.f32 %v296, %v462
    %v465 = vmul.f32 %v300, %v447
    %v467 = vrot.slane %v465, 6
    %v469 = vadd.f32 %v464, %v467
    %v470 = vmul.f32 %v303, %v448
    %v472 = vrot.slane %v470, 6
    %v474 = vadd.f32 %v469, %v472
    %v475 = vmul.f32 %v308, %v446
    %v477 = vrot.slane %v475, 6
    %v479 = vadd.f32 %v307, %v477
    %v480 = vmul.f32 %v311, %v447
    %v482 = vrot.slane %v480, 6
    %v484 = vadd.f32 %v479, %v482
    %v485 = vmul.f32 %v314, %v448
    %v487 = vrot.slane %v485, 6
    %v489 = vadd.f32 %v484, %v487
    %v490 = vmul.f32 %v319, %v446
    %v492 = vrot.slane %v490, 6
    %v494 = vadd.f32 %v318, %v492
    %v495 = vmul.f32 %v322, %v447
    %v497 = vrot.slane %v495, 6
    %v499 = vadd.f32 %v494, %v497
    %v500 = vmul.f32 %v325, %v448
    %v502 = vrot.slane %v500, 6
    %v504 = vadd.f32 %v499, %v502
    %v505 = vtanh.pop %v474
    %v506 = vtanh.pop %v489
    %v507 = vtanh.pop %v504
    %v508 = vmul.f32 %v331, %v505
    %v509 = vmul.f32 %v333, %v506
    %v510 = vadd.f32 %v508, %v509
    %v511 = vmul.f32 %v336, %v507
    %v512 = vadd.f32 %v510, %v511
    %v513 = vld [vmem:[#allocation6 + $0x63] ss:$0 sm:$0xff]
    %v514 = vmul.f32 %v512, %v513
    %v516 = vrot.slane %v514, 6
    %v518 = vadd.f32 %v459, %v516
    %v519 = vadd.f32 %v216, %v295
    %v520 = vmul.f32 %v297, %v505
    %v522 = vrot.slane %v520, 6
    %v524 = vadd.f32 %v519, %v522
    %v525 = vmul.f32 %v300, %v506
    %v527 = vrot.slane %v525, 6
    %v529 = vadd.f32 %v524, %v527
    %v530 = vmul.f32 %v303, %v507
    %v532 = vrot.slane %v530, 6
    %v534 = vadd.f32 %v529, %v532
    %v535 = vadd.f32 %v218, %v306
    %v536 = vmul.f32 %v308, %v505
    %v538 = vrot.slane %v536, 6
    %v540 = vadd.f32 %v535, %v538
    %v541 = vmul.f32 %v311, %v506
    %v543 = vrot.slane %v541, 6
    %v545 = vadd.f32 %v540, %v543
    %v546 = vmul.f32 %v314, %v507
    %v548 = vrot.slane %v546, 6
    %v550 = vadd.f32 %v545, %v548
    %v551 = vadd.f32 %v292, %v317
    %v552 = vmul.f32 %v319, %v505
    %v554 = vrot.slane %v552, 6
    %v556 = vadd.f32 %v551, %v554
    %v557 = vmul.f32 %v322, %v506
    %v559 = vrot.slane %v557, 6
    %v561 = vadd.f32 %v556, %v559
    %v562 = vmul.f32 %v325, %v507
    %v564 = vrot.slane %v562, 6
    %v566 = vadd.f32 %v561, %v564
    %v567 = vtanh.pop %v534
    %v568 = vtanh.pop %v550
    %v569 = vtanh.pop %v566
    %v570 = vmul.f32 %v331, %v567
    %v571 = vmul.f32 %v333, %v568
    %v572 = vadd.f32 %v570, %v571
    %v573 = vmul.f32 %v336, %v569
    %v574 = vadd.f32 %v572, %v573
    %v575 = vld [vmem:[#allocation6 + $0x64] ss:$0 sm:$0xff]
    %v576 = vmul.f32 %v574, %v575
    %v577 = vadd.f32 %v518, %v576
    %v578 = vmul.f32 %v297, %v567
    %v580 = vrot.slane %v578, 6
    %v582 = vadd.f32 %v519, %v580
    %v583 = vmul.f32 %v300, %v568
    %v585 = vrot.slane %v583, 6
    %v587 = vadd.f32 %v582, %v585
    %v588 = vmul.f32 %v303, %v569
    %v590 = vrot.slane %v588, 6
    %v592 = vadd.f32 %v587, %v590
    %v593 = vmul.f32 %v308, %v567
    %v595 = vrot.slane %v593, 6
    %v597 = vadd.f32 %v535, %v595
    %v598 = vmul.f32 %v311, %v568
    %v600 = vrot.slane %v598, 6
    %v602 = vadd.f32 %v597, %v600
    %v603 = vmul.f32 %v314, %v569
    %v605 = vrot.slane %v603, 6
    %v607 = vadd.f32 %v602, %v605
    %v608 = vmul.f32 %v319, %v567
    %v610 = vrot.slane %v608, 6
    %v612 = vadd.f32 %v551, %v610
    %v613 = vmul.f32 %v322, %v568
    %v615 = vrot.slane %v613, 6
    %v617 = vadd.f32 %v612, %v615
    %v618 = vmul.f32 %v325, %v569
    %v620 = vrot.slane %v618, 6
    %v622 = vadd.f32 %v617, %v620
    %v623 = vtanh.pop %v592
    %v624 = vtanh.pop %v607
    %v625 = vtanh.pop %v622
    %v626 = vmul.f32 %v331, %v623
    %v627 = vmul.f32 %v333, %v624
    %v628 = vadd.f32 %v626, %v627
    %v629 = vmul.f32 %v336, %v625
    %v630 = vadd.f32 %v628, %v629
    %v631 = vld [vmem:[#allocation6 + $0x65] ss:$0 sm:$0xff]
    %v632 = vmul.f32 %v630, %v631
    %v634 = vrot.slane %v632, 2
    %v636 = vadd.f32 %v577, %v634
    %v637 = vmul.f32 %v297, %v623
    %v639 = vrot.slane %v637, 6
    %v641 = vadd.f32 %v519, %v639
    %v642 = vmul.f32 %v300, %v624
    %v644 = vrot.slane %v642, 6
    %v646 = vadd.f32 %v641, %v644
    %v647 = vmul.f32 %v303, %v625
    %v649 = vrot.slane %v647, 6
    %v651 = vadd.f32 %v646, %v649
    %v652 = vmul.f32 %v308, %v623
    %v654 = vrot.slane %v652, 6
    %v656 = vadd.f32 %v535, %v654
    %v657 = vmul.f32 %v311, %v624
    %v659 = vrot.slane %v657, 6
    %v661 = vadd.f32 %v656, %v659
    %v662 = vmul.f32 %v314, %v625
    %v664 = vrot.slane %v662, 6
    %v666 = vadd.f32 %v661, %v664
    %v667 = vmul.f32 %v319, %v623
    %v669 = vrot.slane %v667, 6
    %v671 = vadd.f32 %v551, %v669
    %v672 = vmul.f32 %v322, %v624
    %v674 = vrot.slane %v672, 6
    %v676 = vadd.f32 %v671, %v674
    %v677 = vmul.f32 %v325, %v625
    %v679 = vrot.slane %v677, 6
    %v681 = vadd.f32 %v676, %v679
    %v682 = vtanh.pop %v651
    %v683 = vtanh.pop %v666
    %v684 = vtanh.pop %v681
    %v685 = vmul.f32 %v331, %v682
    %v686 = vmul.f32 %v333, %v683
    %v687 = vadd.f32 %v685, %v686
    %v688 = vmul.f32 %v336, %v684
    %v689 = vadd.f32 %v687, %v688
    %v690 = vld [vmem:[#allocation6 + $0x66] ss:$0 sm:$0xff]
    %v691 = vmul.f32 %v689, %v690
    %v693 = vrot.slane %v691, 4
    %v695 = vadd.f32 %v636, %v693
    %v696 = vmul.f32 %v297, %v682
    %v698 = vrot.slane %v696, 6
    %v700 = vadd.f32 %v519, %v698
    %v701 = vmul.f32 %v300, %v683
    %v703 = vrot.slane %v701, 6
    %v705 = vadd.f32 %v700, %v703
    %v706 = vmul.f32 %v303, %v684
    %v708 = vrot.slane %v706, 6
    %v710 = vadd.f32 %v705, %v708
    %v711 = vmul.f32 %v308, %v682
    %v713 = vrot.slane %v711, 6
    %v715 = vadd.f32 %v535, %v713
    %v716 = vmul.f32 %v311, %v683
    %v718 = vrot.slane %v716, 6
    %v720 = vadd.f32 %v715, %v718
    %v721 = vmul.f32 %v314, %v684
    %v723 = vrot.slane %v721, 6
    %v725 = vadd.f32 %v720, %v723
    %v726 = vmul.f32 %v319, %v682
    %v728 = vrot.slane %v726, 6
    %v730 = vadd.f32 %v551, %v728
    %v731 = vmul.f32 %v322, %v683
    %v733 = vrot.slane %v731, 6
    %v735 = vadd.f32 %v730, %v733
    %v736 = vmul.f32 %v325, %v684
    %v738 = vrot.slane %v736, 6
    %v740 = vadd.f32 %v735, %v738
    %v741 = vtanh.pop %v710
    %v742 = vtanh.pop %v725
    %v743 = vtanh.pop %v740
    %v744 = vmul.f32 %v331, %v741
    %v745 = vmul.f32 %v333, %v742
    %v746 = vadd.f32 %v744, %v745
    %v747 = vmul.f32 %v336, %v743
    %v748 = vadd.f32 %v746, %v747
    %v749 = vld [vmem:[#allocation6 + $0x67] ss:$0 sm:$0xff]
    %v750 = vmul.f32 %v748, %v749
    %v752 = vrot.slane %v750, 6
    %v754 = vadd.f32 %v695, %v752
    %v755 = vld [vmem:[#allocation6 + $0x78] ss:$0 sm:$0xff]
    %v756 = vadd.f32 %v754, %v755
    %v757 = vlaneseq
    %v758 = vand.u32 %v757, 127
    %vm759 = vcmp.eq.s32.totalorder %v758, 32
    %v761 = vrot.slane %v756, 2
    %v763 = vsel %vm759, %v741, %v761
    %vm764 = vcmp.eq.s32.totalorder %v758, 33
    %v765 = vsel %vm764, %v742, %v763
    %vm766 = vcmp.eq.s32.totalorder %v758, 34
    %v767 = vsel %vm766, %v743, %v765
    %768 = vst [vmem:[#allocation9 - $0x6] sm:$0xc0] %v767
    // Predicated region
    $region26: #{tpu_custom_call.1} parent=1 // pred_check
      _
    $region27: #{tpu_custom_call.1} parent=1 // pred_check_branch
      %770 = sbr.rel (0) target = $region29
    $region28: #{tpu_custom_call.1} parent=1 // pred_region
      %s772 = ssub.s32 32, 32
      %773 = vsyncadd [#allocation4], %s772
      %s775 = sshll.u32 [#allocation9], 4
      %s776 = int_to_ptr.vmem [resolvable:$true] %s775
      %778 = dma.vmem_to_hbm [thread:$0]  %s776, 32, %s3, [#allocation4]
    $region29: #{tpu_custom_call.1} parent=1 // pred_fallthru
      _
    // Predicated region
    $region30: #{tpu_custom_call.1} parent=1 // pred_check
      _
    $region31: #{tpu_custom_call.1} parent=1 // pred_check_branch
      %780 = sbr.rel (0) target = $region33
    $region32: #{tpu_custom_call.1} parent=1 // pred_region
      %781 = dma.done [#allocation4], 32
    $region33: #{tpu_custom_call.1} parent=1 // pred_fallthru
      _
    %782 = vsyncpa [#allocation3], 1
    %783 = vsyncpa [#allocation7], 1
    %784 = vsyncpa [#allocation4], 1
    %785 = vsyncpa [#allocation5], 1

</llo_original>
